<compile_context>
chip_gen: v7x
topology: tpu7x:2x2x1
jax: 0.10.0
libtpu: 0.0.40
codegen_flags: <defaults>
</compile_context>

<pallas_src>
import jax
import jax.numpy as jnp
from jax import lax
from jax.experimental import pallas as pl
from jax.experimental.pallas import tpu as pltpu

LAYER_DIMS = [(5, 25), (25, 50), (50, 75), (75, 100), (100, 150), (150, 2)]
N_LAYERS = len(LAYER_DIMS)
IN_DIM = LAYER_DIMS[0][0]     # 5
OUT_DIM = LAYER_DIMS[-1][1]   # 2
LANE = 128
IN_PAD = 16                   # fan_in of layer 1 padded to bf16 sublane (16)
OUT_PAD = 128                 # last layer padded to a full lane width
MAX_TILE = 1024               # grid-step batch tile cap (amortizes ~0.35us/step)
CHUNK = 256                   # in-kernel sub-tile: keeps per-layer f32 working
                              # set at ~32 vregs instead of 128 (no vst spill)
SUBLANE = 16                  # bf16 sublane packing -> batch tiles % 16 == 0


def _round_up(x, m):
    return (x + m - 1) // m * m


def _padded_dims():
    dims = []
    prev = IN_PAD
    for fan_in, fan_out in LAYER_DIMS:
        out_p = _round_up(fan_out, LANE)
        dims.append((prev, out_p))
        prev = out_p
    return dims


# [(16,128), (128,128), (128,128), (128,128), (128,256), (256,128)]
PADDED_DIMS = _padded_dims()


def mlp_kernel(x_ref,
               w1, b1, w2, b2, w3, b3, w4, b4, w5, b5, w6, b6,
               o_ref):
    """One batch tile: x (TB, 16) f32 -> o (TB, 128) f32 (cols >= 2 are pad)."""
    weights = (w1, w2, w3, w4, w5, w6)
    biases = (b1, b2, b3, b4, b5, b6)
    tb = x_ref.shape[0]
    n_full = tb // CHUNK
    tail = tb - n_full * CHUNK

    def run_block(row0, rows):
        # Cast the tiny x chunk to bf16 in-kernel (no wrapper-side cast).
        h = x_ref[pl.ds(row0, rows), :].astype(jnp.bfloat16)
        z = None
        for li in range(N_LAYERS):
            # bf16 x bf16 MXU matmul, f32 accumulate; f32 bias add on the VPU.
            z = jnp.dot(h, weights[li][...],
                        preferred_element_type=jnp.float32) + biases[li][...]
            if li < N_LAYERS - 1:
                # ReLU in f32 (v5e-safe), back to bf16 for the next MXU pass.
                h = jnp.maximum(z, 0.0).astype(jnp.bfloat16)
        # Exact sigmoid: exp (EUP) + exact reciprocal. Lane-dense store.
        o_ref[pl.ds(row0, rows), :] = pl.reciprocal(1.0 + jnp.exp(-z),
                                                    approx=False)

    if n_full > 0:
        def body(c, carry):
            run_block(pl.multiple_of(c * CHUNK, CHUNK), CHUNK)
            return carry
        lax.fori_loop(0, n_full, body, 0, unroll=True)
    if tail > 0:
        run_block(n_full * CHUNK, tail)


def init_params(key):
    """PyTorch nn.Linear default init U(+/- 1/sqrt(fan_in)), stored already
    transposed to (in, out) so the kernel computes y = x @ W + b."""
    params = []
    for fan_in, fan_out in LAYER_DIMS:
        key, kw, kb = jax.random.split(key, 3)
        bound = 1.0 / float(fan_in) ** 0.5
        w = jax.random.uniform(kw, (fan_in, fan_out), jnp.float32, -bound, bound)
        b = jax.random.uniform(kb, (1, fan_out), jnp.float32, -bound, bound)
        params.append((w, b))
    return params


def pack_params(params):
    """Zero-pad each layer to lane/sublane-aligned widths and cast weights to
    bf16. Zero padding is numerically exact: padded input columns hit zero
    weight rows, padded output columns stay 0 through ReLU (and are sliced off
    after the sigmoid for the last layer)."""
    flat = []
    for (w, b), (in_p, out_p) in zip(params, PADDED_DIMS):
        fan_in, fan_out = w.shape
        w_p = jnp.zeros((in_p, out_p), jnp.float32).at[:fan_in, :fan_out].set(w)
        b_p = jnp.zeros((1, out_p), jnp.float32).at[:, :fan_out].set(b)
        flat.append(w_p.astype(jnp.bfloat16))   # MXU operand: bf16
        flat.append(b_p)                        # bias add stays f32
    return flat


@jax.jit
def net_forward(x, packed_params):
    batch = x.shape[0]

    # Balanced tiles: minimize padding, cap at MAX_TILE, and give v7x's second
    # TensorCore work once the batch is large enough to amortize step overhead.
    n_tiles = max(1, pl.cdiv(batch, MAX_TILE))
    if n_tiles == 1 and batch >= 2 * CHUNK:
        n_tiles = 2
    tb = _round_up(pl.cdiv(batch, n_tiles), SUBLANE)
    padded_batch = tb * n_tiles

    # Single pad op: batch rows -> padded_batch, features 5 -> 16. No dtype
    # cast here (done in-kernel on the per-chunk tile).
    x_p = jnp.pad(x, ((0, padded_batch - batch), (0, IN_PAD - IN_DIM)))

    grid = (n_tiles,)
    # x / out stream one batch tile per grid step (Pallas double-buffers them);
    # weights & biases use a constant block index -> fetched once, VMEM-resident.
    x_spec = pl.BlockSpec((tb, IN_PAD), lambda i: (i, 0))
    out_spec = pl.BlockSpec((tb, OUT_PAD), lambda i: (i, 0))
    param_specs = [pl.BlockSpec(p.shape, lambda i: (0, 0)) for p in packed_params]

    out = pl.pallas_call(
        mlp_kernel,
        out_shape=jax.ShapeDtypeStruct((padded_batch, OUT_PAD), jnp.float32),
        grid=grid,
        in_specs=[x_spec] + param_specs,
        out_specs=out_spec,
        compiler_params=pltpu.CompilerParams(
            # Batch tiles are independent: shard across both v7x TensorCores.
            dimension_semantics=("parallel",),
        ),
    )(x_p, *packed_params)
    return out[:batch, :OUT_DIM]


def net_forward_ref(x, params):
    """Pure-JAX f32 reference matching the PyTorch forward."""
    h = x.astype(jnp.float32)
    for i, (w, b) in enumerate(params):
        h = h @ w + b
        if i < len(params) - 1:
            h = jnp.maximum(h, 0.0)
    return jax.nn.sigmoid(h)


if __name__ == "__main__":
    key = jax.random.PRNGKey(0)
    key, kx = jax.random.split(key)
    batch = 8
    x = jax.random.normal(kx, (batch, IN_DIM), jnp.float32)

    params = init_params(key)         # logical f32 params
    packed = pack_params(params)      # padded bf16 weights / f32 biases

    out = net_forward(x, packed)
    jax.block_until_ready(out)

    ref = net_forward_ref(x, params)
    assert out.shape == (batch, OUT_DIM), out.shape
    # bf16 MXU operands (f32 accumulate) vs the pure-f32 reference.
    assert jnp.allclose(out, ref, atol=2e-2, rtol=0.0), (out, ref)
    print("KERNEL_OK")
</pallas_src>

<mosaic_0001>
module attributes {stable_mosaic.version = 11 : i64} {
  func.func @mlp_kernel(%arg0: i32, %arg1: memref<16x16xf32, #tpu.memory_space<vmem>>, %arg2: memref<16x128xbf16, #tpu.memory_space<vmem>>, %arg3: memref<1x128xf32, #tpu.memory_space<vmem>>, %arg4: memref<128x128xbf16, #tpu.memory_space<vmem>>, %arg5: memref<1x128xf32, #tpu.memory_space<vmem>>, %arg6: memref<128x128xbf16, #tpu.memory_space<vmem>>, %arg7: memref<1x128xf32, #tpu.memory_space<vmem>>, %arg8: memref<128x128xbf16, #tpu.memory_space<vmem>>, %arg9: memref<1x128xf32, #tpu.memory_space<vmem>>, %arg10: memref<128x256xbf16, #tpu.memory_space<vmem>>, %arg11: memref<1x256xf32, #tpu.memory_space<vmem>>, %arg12: memref<256x128xbf16, #tpu.memory_space<vmem>>, %arg13: memref<1x128xf32, #tpu.memory_space<vmem>>, %arg14: memref<16x128xf32, #tpu.memory_space<vmem>>) attributes {dimension_semantics = [#tpu.dimension_semantics<parallel>], iteration_bounds = array<i64: 1>, scalar_prefetch = 0 : i64, scratch_operands = 0 : i64, tpu.core_type = #tpu.core_type<tc>, window_params = [{transform_indices = @transform_0, window_bounds = array<i64: 16, 16>}, {pipeline_mode = #tpu.pipeline_mode<synchronous>, transform_indices = @transform_1, window_bounds = array<i64: 16, 128>}, {pipeline_mode = #tpu.pipeline_mode<synchronous>, transform_indices = @transform_2, window_bounds = array<i64: 1, 128>}, {pipeline_mode = #tpu.pipeline_mode<synchronous>, transform_indices = @transform_3, window_bounds = array<i64: 128, 128>}, {pipeline_mode = #tpu.pipeline_mode<synchronous>, transform_indices = @transform_4, window_bounds = array<i64: 1, 128>}, {pipeline_mode = #tpu.pipeline_mode<synchronous>, transform_indices = @transform_5, window_bounds = array<i64: 128, 128>}, {pipeline_mode = #tpu.pipeline_mode<synchronous>, transform_indices = @transform_6, window_bounds = array<i64: 1, 128>}, {pipeline_mode = #tpu.pipeline_mode<synchronous>, transform_indices = @transform_7, window_bounds = array<i64: 128, 128>}, {pipeline_mode = #tpu.pipeline_mode<synchronous>, transform_indices = @transform_8, window_bounds = array<i64: 1, 128>}, {pipeline_mode = #tpu.pipeline_mode<synchronous>, transform_indices = @transform_9, window_bounds = array<i64: 128, 256>}, {pipeline_mode = #tpu.pipeline_mode<synchronous>, transform_indices = @transform_10, window_bounds = array<i64: 1, 256>}, {pipeline_mode = #tpu.pipeline_mode<synchronous>, transform_indices = @transform_11, window_bounds = array<i64: 256, 128>}, {pipeline_mode = #tpu.pipeline_mode<synchronous>, transform_indices = @transform_12, window_bounds = array<i64: 1, 128>}, {transform_indices = @transform_13, window_bounds = array<i64: 16, 128>}]} {
    %c0 = arith.constant 0 : index
    %c0_0 = arith.constant 0 : index
    %0 = vector.load %arg1[%c0, %c0_0] : memref<16x16xf32, #tpu.memory_space<vmem>>, vector<16x16xf32>
    %1 = arith.truncf %0 : vector<16x16xf32> to vector<16x16xbf16>
    %c0_1 = arith.constant 0 : index
    %c0_2 = arith.constant 0 : index
    %2 = vector.load %arg2[%c0_1, %c0_2] : memref<16x128xbf16, #tpu.memory_space<vmem>>, vector<16x128xbf16>
    %cst = arith.constant dense<0.000000e+00> : vector<16x128xf32>
    %3 = tpu.matmul %1, %2, %cst {dimension_numbers = #tpu.dot_dimension_numbers<[1], [0], [0], [1], [0, 0, 1, 1], [], []>} : vector<16x16xbf16>, vector<16x128xbf16>, vector<16x128xf32> -> vector<16x128xf32>
    %c0_3 = arith.constant 0 : index
    %c0_4 = arith.constant 0 : index
    %4 = vector.load %arg3[%c0_3, %c0_4] : memref<1x128xf32, #tpu.memory_space<vmem>>, vector<1x128xf32>
    %5 = vector.broadcast %4 : vector<1x128xf32> to vector<16x128xf32>
    %6 = arith.addf %3, %5 : vector<16x128xf32>
    %cst_5 = arith.constant 0.000000e+00 : f32
    %7 = vector.broadcast %cst_5 : f32 to vector<16x128xf32>
    %8 = arith.maximumf %6, %7 : vector<16x128xf32>
    %9 = arith.truncf %8 : vector<16x128xf32> to vector<16x128xbf16>
    %c0_6 = arith.constant 0 : index
    %c0_7 = arith.constant 0 : index
    %10 = vector.load %arg4[%c0_6, %c0_7] : memref<128x128xbf16, #tpu.memory_space<vmem>>, vector<128x128xbf16>
    %cst_8 = arith.constant dense<0.000000e+00> : vector<16x128xf32>
    %11 = tpu.matmul %9, %10, %cst_8 {dimension_numbers = #tpu.dot_dimension_numbers<[1], [0], [0], [1], [0, 0, 1, 1], [], []>} : vector<16x128xbf16>, vector<128x128xbf16>, vector<16x128xf32> -> vector<16x128xf32>
    %c0_9 = arith.constant 0 : index
    %c0_10 = arith.constant 0 : index
    %12 = vector.load %arg5[%c0_9, %c0_10] : memref<1x128xf32, #tpu.memory_space<vmem>>, vector<1x128xf32>
    %13 = vector.broadcast %12 : vector<1x128xf32> to vector<16x128xf32>
    %14 = arith.addf %11, %13 : vector<16x128xf32>
    %cst_11 = arith.constant 0.000000e+00 : f32
    %15 = vector.broadcast %cst_11 : f32 to vector<16x128xf32>
    %16 = arith.maximumf %14, %15 : vector<16x128xf32>
    %17 = arith.truncf %16 : vector<16x128xf32> to vector<16x128xbf16>
    %c0_12 = arith.constant 0 : index
    %c0_13 = arith.constant 0 : index
    %18 = vector.load %arg6[%c0_12, %c0_13] : memref<128x128xbf16, #tpu.memory_space<vmem>>, vector<128x128xbf16>
    %cst_14 = arith.constant dense<0.000000e+00> : vector<16x128xf32>
    %19 = tpu.matmul %17, %18, %cst_14 {dimension_numbers = #tpu.dot_dimension_numbers<[1], [0], [0], [1], [0, 0, 1, 1], [], []>} : vector<16x128xbf16>, vector<128x128xbf16>, vector<16x128xf32> -> vector<16x128xf32>
    %c0_15 = arith.constant 0 : index
    %c0_16 = arith.constant 0 : index
    %20 = vector.load %arg7[%c0_15, %c0_16] : memref<1x128xf32, #tpu.memory_space<vmem>>, vector<1x128xf32>
    %21 = vector.broadcast %20 : vector<1x128xf32> to vector<16x128xf32>
    %22 = arith.addf %19, %21 : vector<16x128xf32>
    %cst_17 = arith.constant 0.000000e+00 : f32
    %23 = vector.broadcast %cst_17 : f32 to vector<16x128xf32>
    %24 = arith.maximumf %22, %23 : vector<16x128xf32>
    %25 = arith.truncf %24 : vector<16x128xf32> to vector<16x128xbf16>
    %c0_18 = arith.constant 0 : index
    %c0_19 = arith.constant 0 : index
    %26 = vector.load %arg8[%c0_18, %c0_19] : memref<128x128xbf16, #tpu.memory_space<vmem>>, vector<128x128xbf16>
    %cst_20 = arith.constant dense<0.000000e+00> : vector<16x128xf32>
    %27 = tpu.matmul %25, %26, %cst_20 {dimension_numbers = #tpu.dot_dimension_numbers<[1], [0], [0], [1], [0, 0, 1, 1], [], []>} : vector<16x128xbf16>, vector<128x128xbf16>, vector<16x128xf32> -> vector<16x128xf32>
    %c0_21 = arith.constant 0 : index
    %c0_22 = arith.constant 0 : index
    %28 = vector.load %arg9[%c0_21, %c0_22] : memref<1x128xf32, #tpu.memory_space<vmem>>, vector<1x128xf32>
    %29 = vector.broadcast %28 : vector<1x128xf32> to vector<16x128xf32>
    %30 = arith.addf %27, %29 : vector<16x128xf32>
    %cst_23 = arith.constant 0.000000e+00 : f32
    %31 = vector.broadcast %cst_23 : f32 to vector<16x128xf32>
    %32 = arith.maximumf %30, %31 : vector<16x128xf32>
    %33 = arith.truncf %32 : vector<16x128xf32> to vector<16x128xbf16>
    %c0_24 = arith.constant 0 : index
    %c0_25 = arith.constant 0 : index
    %34 = vector.load %arg10[%c0_24, %c0_25] : memref<128x256xbf16, #tpu.memory_space<vmem>>, vector<128x256xbf16>
    %cst_26 = arith.constant dense<0.000000e+00> : vector<16x256xf32>
    %35 = tpu.matmul %33, %34, %cst_26 {dimension_numbers = #tpu.dot_dimension_numbers<[1], [0], [0], [1], [0, 0, 1, 1], [], []>} : vector<16x128xbf16>, vector<128x256xbf16>, vector<16x256xf32> -> vector<16x256xf32>
    %c0_27 = arith.constant 0 : index
    %c0_28 = arith.constant 0 : index
    %36 = vector.load %arg11[%c0_27, %c0_28] : memref<1x256xf32, #tpu.memory_space<vmem>>, vector<1x256xf32>
    %37 = vector.broadcast %36 : vector<1x256xf32> to vector<16x256xf32>
    %38 = arith.addf %35, %37 : vector<16x256xf32>
    %cst_29 = arith.constant 0.000000e+00 : f32
    %39 = vector.broadcast %cst_29 : f32 to vector<16x256xf32>
    %40 = arith.maximumf %38, %39 : vector<16x256xf32>
    %41 = arith.truncf %40 : vector<16x256xf32> to vector<16x256xbf16>
    %c0_30 = arith.constant 0 : index
    %c0_31 = arith.constant 0 : index
    %42 = vector.load %arg12[%c0_30, %c0_31] : memref<256x128xbf16, #tpu.memory_space<vmem>>, vector<256x128xbf16>
    %cst_32 = arith.constant dense<0.000000e+00> : vector<16x128xf32>
    %43 = tpu.matmul %41, %42, %cst_32 {dimension_numbers = #tpu.dot_dimension_numbers<[1], [0], [0], [1], [0, 0, 1, 1], [], []>} : vector<16x256xbf16>, vector<256x128xbf16>, vector<16x128xf32> -> vector<16x128xf32>
    %c0_33 = arith.constant 0 : index
    %c0_34 = arith.constant 0 : index
    %44 = vector.load %arg13[%c0_33, %c0_34] : memref<1x128xf32, #tpu.memory_space<vmem>>, vector<1x128xf32>
    %45 = vector.broadcast %44 : vector<1x128xf32> to vector<16x128xf32>
    %46 = arith.addf %43, %45 : vector<16x128xf32>
    %cst_35 = arith.constant 0.000000e+00 : f32
    %47 = vector.broadcast %cst_35 : f32 to vector<16x128xf32>
    %48 = arith.subf %47, %46 : vector<16x128xf32>
    %49 = math.exp %48 : vector<16x128xf32>
    %cst_36 = arith.constant 1.000000e+00 : f32
    %50 = vector.broadcast %cst_36 : f32 to vector<16x128xf32>
    %51 = arith.addf %50, %49 : vector<16x128xf32>
    %52 = tpu.reciprocal %51 : vector<16x128xf32> -> vector<16x128xf32>
    %c0_37 = arith.constant 0 : index
    %c0_38 = arith.constant 0 : index
    %53 = vector.load %arg14[%c0_37, %c0_38] : memref<16x128xf32, #tpu.memory_space<vmem>>, vector<16x128xf32>
    tpu.vector_store %arg14[%c0_37, %c0_38], %52 {strides = array<i32>} : memref<16x128xf32, #tpu.memory_space<vmem>>, vector<16x128xf32>,
    return
  }
  func.func @transform_0(%arg0: i32) -> (i32, i32) {
    %c0_i32 = arith.constant 0 : i32
    %c0_i32_0 = arith.constant 0 : i32
    return %arg0, %c0_i32 : i32, i32
  }
  func.func @transform_1(%arg0: i32) -> (i32, i32) {
    %c0_i32 = arith.constant 0 : i32
    %c0_i32_0 = arith.constant 0 : i32
    %c0_i32_1 = arith.constant 0 : i32
    return %c0_i32, %c0_i32_0 : i32, i32
  }
  func.func @transform_2(%arg0: i32) -> (i32, i32) {
    %c0_i32 = arith.constant 0 : i32
    %c0_i32_0 = arith.constant 0 : i32
    %c0_i32_1 = arith.constant 0 : i32
    return %c0_i32, %c0_i32_0 : i32, i32
  }
  func.func @transform_3(%arg0: i32) -> (i32, i32) {
    %c0_i32 = arith.constant 0 : i32
    %c0_i32_0 = arith.constant 0 : i32
    %c0_i32_1 = arith.constant 0 : i32
    return %c0_i32, %c0_i32_0 : i32, i32
  }
  func.func @transform_4(%arg0: i32) -> (i32, i32) {
    %c0_i32 = arith.constant 0 : i32
    %c0_i32_0 = arith.constant 0 : i32
    %c0_i32_1 = arith.constant 0 : i32
    return %c0_i32, %c0_i32_0 : i32, i32
  }
  func.func @transform_5(%arg0: i32) -> (i32, i32) {
    %c0_i32 = arith.constant 0 : i32
    %c0_i32_0 = arith.constant 0 : i32
    %c0_i32_1 = arith.constant 0 : i32
    return %c0_i32, %c0_i32_0 : i32, i32
  }
  func.func @transform_6(%arg0: i32) -> (i32, i32) {
    %c0_i32 = arith.constant 0 : i32
    %c0_i32_0 = arith.constant 0 : i32
    %c0_i32_1 = arith.constant 0 : i32
    return %c0_i32, %c0_i32_0 : i32, i32
  }
  func.func @transform_7(%arg0: i32) -> (i32, i32) {
    %c0_i32 = arith.constant 0 : i32
    %c0_i32_0 = arith.constant 0 : i32
    %c0_i32_1 = arith.constant 0 : i32
    return %c0_i32, %c0_i32_0 : i32, i32
  }
  func.func @transform_8(%arg0: i32) -> (i32, i32) {
    %c0_i32 = arith.constant 0 : i32
    %c0_i32_0 = arith.constant 0 : i32
    %c0_i32_1 = arith.constant 0 : i32
    return %c0_i32, %c0_i32_0 : i32, i32
  }
  func.func @transform_9(%arg0: i32) -> (i32, i32) {
    %c0_i32 = arith.constant 0 : i32
    %c0_i32_0 = arith.constant 0 : i32
    %c0_i32_1 = arith.constant 0 : i32
    return %c0_i32, %c0_i32_0 : i32, i32
  }
  func.func @transform_10(%arg0: i32) -> (i32, i32) {
    %c0_i32 = arith.constant 0 : i32
    %c0_i32_0 = arith.constant 0 : i32
    %c0_i32_1 = arith.constant 0 : i32
    return %c0_i32, %c0_i32_0 : i32, i32
  }
  func.func @transform_11(%arg0: i32) -> (i32, i32) {
    %c0_i32 = arith.constant 0 : i32
    %c0_i32_0 = arith.constant 0 : i32
    %c0_i32_1 = arith.constant 0 : i32
    return %c0_i32, %c0_i32_0 : i32, i32
  }
  func.func @transform_12(%arg0: i32) -> (i32, i32) {
    %c0_i32 = arith.constant 0 : i32
    %c0_i32_0 = arith.constant 0 : i32
    %c0_i32_1 = arith.constant 0 : i32
    return %c0_i32, %c0_i32_0 : i32, i32
  }
  func.func @transform_13(%arg0: i32) -> (i32, i32) {
    %c0_i32 = arith.constant 0 : i32
    %c0_i32_0 = arith.constant 0 : i32
    return %arg0, %c0_i32 : i32, i32
  }
}

</mosaic_0001>

<llo_original>
// kernel: net_forward.1
$region0: #{net_forward.1}
  #allocation0 [shape = 'u32[]', space=smem, size = 0x4, offset = 0x4, fixed_abs, tag = 'smem constant byte address 0x4 - core index']
  #allocation1 [shape = 'u32[144,128]{1,0:T(1,128)}', space=vmem, size = 0x12000, scoped, tag = 'internal scratch']
  %s0 = inlined_call_operand.vmem [shape: f32[16,16], index: 0, kind: input, shape index: {}]
  %s1 = inlined_call_operand.vmem [shape: bf16[16,128], index: 1, kind: input, shape index: {}]
  %s2 = inlined_call_operand.vmem [shape: f32[1,128], index: 2, kind: input, shape index: {}]
  %s3 = inlined_call_operand.hbm [shape: bf16[128,128], index: 3, kind: input, shape index: {}]
  %s4 = inlined_call_operand.vmem [shape: f32[1,128], index: 4, kind: input, shape index: {}]
  %s5 = inlined_call_operand.hbm [shape: bf16[128,128], index: 5, kind: input, shape index: {}]
  %s6 = inlined_call_operand.vmem [shape: f32[1,128], index: 6, kind: input, shape index: {}]
  %s7 = inlined_call_operand.hbm [shape: bf16[128,128], index: 7, kind: input, shape index: {}]
  %s8 = inlined_call_operand.vmem [shape: f32[1,128], index: 8, kind: input, shape index: {}]
  %s9 = inlined_call_operand.hbm [shape: bf16[128,256], index: 9, kind: input, shape index: {}]
  %s10 = inlined_call_operand.vmem [shape: f32[1,256], index: 10, kind: input, shape index: {}]
  %s11 = inlined_call_operand.hbm [shape: bf16[256,128], index: 11, kind: input, shape index: {}]
  %s12 = inlined_call_operand.vmem [shape: f32[1,128], index: 12, kind: input, shape index: {}]
  %s13 = inlined_call_operand.vmem [shape: f32[16,128], index: 13, kind: output, shape index: {}]
  %s14 = sld [smem:[#allocation0]]
  $region82: #{net_forward.1} parent=0
    _
  %s16 = ssub.s32 1, %s14
  %s17 = scalar_select 0, %s16, %s14
  $region1: #{net_forward.1} parent=0
    #allocation2 [shape = 'u8[32768]{0}', space=vmem, size = 0x8000, scoped, tag = 'input window, operand 3, single buffered']
    #allocation3 [shape = 's32[1]{0}', space=sflag, size = 0x4, scoped, tag = 'scoped memory for net_forward.1']
    #allocation4 [shape = 'u8[32768]{0}', space=vmem, size = 0x8000, scoped, tag = 'input window, operand 5, single buffered']
    #allocation5 [shape = 's32[1]{0}', space=sflag, size = 0x4, scoped, tag = 'scoped memory for net_forward.1']
    #allocation6 [shape = 'u8[32768]{0}', space=vmem, size = 0x8000, scoped, tag = 'input window, operand 7, single buffered']
    #allocation7 [shape = 'u8[65536]{0}', space=vmem, size = 0x10000, scoped, tag = 'input window, operand 9, single buffered']
    #allocation8 [shape = 's32[1]{0}', space=sflag, size = 0x4, scoped, tag = 'scoped memory for net_forward.1']
    #allocation9 [shape = 'u8[65536]{0}', space=vmem, size = 0x10000, scoped, tag = 'input window, operand 11, single buffered']
    %18 = vsyncpa [#allocation3], 0
    %19 = vsyncpa [#allocation5], 0
    %20 = vsyncpa [#allocation8], 0
    // Predicated region
    $region2: #{net_forward.1} parent=1 // pred_check
      _
    $region3: #{net_forward.1} parent=1 // pred_check_branch
      %22 = sbr.rel (0) target = $region5
    $region4: #{net_forward.1} parent=1 // pred_region
      _
    $region5: #{net_forward.1} parent=1 // pred_fallthru
      _
    // Predicated region
    $region6: #{net_forward.1} parent=1 // pred_check
      _
    $region7: #{net_forward.1} parent=1 // pred_check_branch
      %24 = sbr.rel (0) target = $region9
    $region8: #{net_forward.1} parent=1 // pred_region
      _
    $region9: #{net_forward.1} parent=1 // pred_fallthru
      _
    // Predicated region
    $region10: #{net_forward.1} parent=1 // pred_check
      _
    $region11: #{net_forward.1} parent=1 // pred_check_branch
      %26 = sbr.rel (0) target = $region13
    $region12: #{net_forward.1} parent=1 // pred_region
      _
    $region13: #{net_forward.1} parent=1 // pred_fallthru
      _
    // Predicated region
    $region14: #{net_forward.1} parent=1 // pred_check
      _
    $region15: #{net_forward.1} parent=1 // pred_check_branch
      %28 = sbr.rel (0) target = $region17
    $region16: #{net_forward.1} parent=1 // pred_region
      %s30 = ssub.s32 1024, 1024
      %31 = vsyncadd [#allocation3], %s30
      %s32 = sshll.u32 [#allocation2], 4
      %s33 = int_to_ptr.vmem [resolvable:$true] %s32
      %38 = dma.hbm_to_vmem [thread:$0]  %s3, 1024, %s33, [#allocation3], 64, 64, 4
    $region17: #{net_forward.1} parent=1 // pred_fallthru
      _
    // Predicated region
    $region18: #{net_forward.1} parent=1 // pred_check
      _
    $region19: #{net_forward.1} parent=1 // pred_check_branch
      %40 = sbr.rel (0) target = $region21
    $region20: #{net_forward.1} parent=1 // pred_region
      _
    $region21: #{net_forward.1} parent=1 // pred_fallthru
      _
    // Predicated region
    $region22: #{net_forward.1} parent=1 // pred_check
      _
    $region23: #{net_forward.1} parent=1 // pred_check_branch
      %42 = sbr.rel (0) target = $region25
    $region24: #{net_forward.1} parent=1 // pred_region
      %s44 = ssub.s32 1024, 1024
      %45 = vsyncadd [#allocation5], %s44
      %s46 = sshll.u32 [#allocation4], 4
      %s47 = int_to_ptr.vmem [resolvable:$true] %s46
      %52 = dma.hbm_to_vmem [thread:$0]  %s5, 1024, %s47, [#allocation5], 64, 64, 4
    $region25: #{net_forward.1} parent=1 // pred_fallthru
      _
    // Predicated region
    $region26: #{net_forward.1} parent=1 // pred_check
      _
    $region27: #{net_forward.1} parent=1 // pred_check_branch
      %54 = sbr.rel (0) target = $region29
    $region28: #{net_forward.1} parent=1 // pred_region
      _
    $region29: #{net_forward.1} parent=1 // pred_fallthru
      _
    // Predicated region
    $region30: #{net_forward.1} parent=1 // pred_check
      _
    $region31: #{net_forward.1} parent=1 // pred_check_branch
      %56 = sbr.rel (0) target = $region33
    $region32: #{net_forward.1} parent=1 // pred_region
      %s58 = ssub.s32 1024, 1024
      %59 = vsyncadd [#allocation5], %s58
      %s60 = sshll.u32 [#allocation6], 4
      %s61 = int_to_ptr.vmem [resolvable:$true] %s60
      %66 = dma.hbm_to_vmem [thread:$0]  %s7, 1024, %s61, [#allocation5], 64, 64, 4
    $region33: #{net_forward.1} parent=1 // pred_fallthru
      _
    // Predicated region
    $region34: #{net_forward.1} parent=1 // pred_check
      _
    $region35: #{net_forward.1} parent=1 // pred_check_branch
      %68 = sbr.rel (0) target = $region37
    $region36: #{net_forward.1} parent=1 // pred_region
      _
    $region37: #{net_forward.1} parent=1 // pred_fallthru
      _
    // Predicated region
    $region38: #{net_forward.1} parent=1 // pred_check
      _
    $region39: #{net_forward.1} parent=1 // pred_check_branch
      %70 = sbr.rel (0) target = $region41
    $region40: #{net_forward.1} parent=1 // pred_region
      %s72 = ssub.s32 2048, 2048
      %73 = vsyncadd [#allocation8], %s72
      %s74 = sshll.u32 [#allocation7], 4
      %s75 = int_to_ptr.vmem [resolvable:$true] %s74
      %80 = dma.hbm_to_vmem [thread:$0]  %s9, 2048, %s75, [#allocation8], 128, 128, 8
    $region41: #{net_forward.1} parent=1 // pred_fallthru
      _
    // Predicated region
    $region42: #{net_forward.1} parent=1 // pred_check
      _
    $region43: #{net_forward.1} parent=1 // pred_check_branch
      %82 = sbr.rel (0) target = $region45
    $region44: #{net_forward.1} parent=1 // pred_region
      _
    $region45: #{net_forward.1} parent=1 // pred_fallthru
      _
    // Predicated region
    $region46: #{net_forward.1} parent=1 // pred_check
      _
    $region47: #{net_forward.1} parent=1 // pred_check_branch
      %84 = sbr.rel (0) target = $region49
    $region48: #{net_forward.1} parent=1 // pred_region
      %s86 = ssub.s32 2048, 2048
      %87 = vsyncadd [#allocation8], %s86
      %s88 = sshll.u32 [#allocation9], 4
      %s89 = int_to_ptr.vmem [resolvable:$true] %s88
      %94 = dma.hbm_to_vmem [thread:$0]  %s11, 2048, %s89, [#allocation8], 64, 64, 4
    $region49: #{net_forward.1} parent=1 // pred_fallthru
      _
    // Predicated region
    $region50: #{net_forward.1} parent=1 // pred_check
      _
    $region51: #{net_forward.1} parent=1 // pred_check_branch
      %96 = sbr.rel (0) target = $region53
    $region52: #{net_forward.1} parent=1 // pred_region
      _
    $region53: #{net_forward.1} parent=1 // pred_fallthru
      _
    // Predicated region
    $region54: #{net_forward.1} parent=1 // pred_check
      _
    $region55: #{net_forward.1} parent=1 // pred_check_branch
      %98 = sbr.rel (0) target = $region57
    $region56: #{net_forward.1} parent=1 // pred_region
      %99 = dma.done [#allocation3], 1024
    $region57: #{net_forward.1} parent=1 // pred_fallthru
      _
    // Predicated region
    $region58: #{net_forward.1} parent=1 // pred_check
      _
    $region59: #{net_forward.1} parent=1 // pred_check_branch
      %101 = sbr.rel (0) target = $region61
    $region60: #{net_forward.1} parent=1 // pred_region
      %102 = dma.done [#allocation5], 1024
    $region61: #{net_forward.1} parent=1 // pred_fallthru
      _
    // Predicated region
    $region62: #{net_forward.1} parent=1 // pred_check
      _
    $region63: #{net_forward.1} parent=1 // pred_check_branch
      %104 = sbr.rel (0) target = $region65
    $region64: #{net_forward.1} parent=1 // pred_region
      %105 = dma.done [#allocation5], 1024
    $region65: #{net_forward.1} parent=1 // pred_fallthru
      _
    // Predicated region
    $region66: #{net_forward.1} parent=1 // pred_check
      _
    $region67: #{net_forward.1} parent=1 // pred_check_branch
      %107 = sbr.rel (0) target = $region69
    $region68: #{net_forward.1} parent=1 // pred_region
      %108 = dma.done [#allocation8], 2048
    $region69: #{net_forward.1} parent=1 // pred_fallthru
      _
    // Predicated region
    $region70: #{net_forward.1} parent=1 // pred_check
      _
    $region71: #{net_forward.1} parent=1 // pred_check_branch
      %110 = sbr.rel (0) target = $region73
    $region72: #{net_forward.1} parent=1 // pred_region
      %111 = dma.done [#allocation8], 2048
    $region73: #{net_forward.1} parent=1 // pred_fallthru
      _
    %v113 = vld [vmem:[%s0] sm:$0xff]
    %v114 = vld [vmem:[%s0 + $0x8] sm:$0xff]
    %v115 = vpack.c.bf16 %v114, %v113
    %v116 = vld [vmem:[%s1] sm:$0xf]
    %v117 = vld [vmem:[%s1 + $0x4] sm:$0xf]
    %v118 = vld [vmem:[%s2] sm:$0x1]
    %v120 = vlaneseq
    %v121 = vshrl.u32 %v120, 7
    %v122 = vsub.s32 0, %v121
    %v123 = vrot.slane %v118, %v122
    %v127 = vunpack.c.l.b16 %v116
    %v128 = vunpack.c.l.b16 %v117
    %v129 = vpack.c.b16 %v128, %v127
    %vm131 = vcmask 130048
    %v133 = vsel %vm131, %v115, 0
    %135 = vmatprep.subr.bf16.mxu0 0
    %136 = vmatpush1.bf16.msra.mxu0 %v129
    %137 = vmatprep.subr.bf16.mxu0 0
    %138 = vmatpush1.bf16.msra.mxu0 0
    %139 = vmatprep.subr.bf16.mxu0 0
    %140 = vmatpush1.bf16.msra.mxu0 0
    %141 = vmatprep.subr.bf16.mxu0 0
    %142 = vmatpush1.bf16.msra.mxu0 0
    %143 = vmatprep.subr.bf16.mxu0 0
    %144 = vmatpush1.bf16.msra.mxu0 0
    %145 = vmatprep.subr.bf16.mxu0 0
    %146 = vmatpush1.bf16.msra.mxu0 0
    %147 = vmatprep.subr.bf16.mxu0 0
    %148 = vmatpush1.bf16.msra.mxu0 0
    %149 = vmatprep.subr.bf16.mxu0 0
    %150 = vmatpush1.bf16.msra.mxu0 0
    %151 = vmatprep.subr.bf16.mxu0 0
    %152 = vmatpush1.bf16.msra.mxu0 0
    %153 = vmatprep.subr.bf16.mxu0 0
    %154 = vmatpush1.bf16.msra.mxu0 0
    %155 = vmatprep.subr.bf16.mxu0 0
    %156 = vmatpush1.bf16.msra.mxu0 0
    %157 = vmatprep.subr.bf16.mxu0 0
    %158 = vmatpush1.bf16.msra.mxu0 0
    %159 = vmatprep.subr.bf16.mxu0 0
    %160 = vmatpush1.bf16.msra.mxu0 0
    %161 = vmatprep.subr.bf16.mxu0 0
    %162 = vmatpush1.bf16.msra.mxu0 0
    %163 = vmatprep.subr.bf16.mxu0 0
    %164 = vmatpush1.bf16.msra.mxu0 0
    %165 = vmatprep.subr.bf16.mxu0 0
    %166 = vmatpush1.bf16.msra.mxu0 0
    %167 = vmatprep.mubr.bf16.mxu0 0
    %168 = vmatmul.mubr.bf16.gmra.mrb[0].mxu0 %v133
    %v169 = vpop.f32.mrb[0].mxu0
    %v170 = vadd.f32 %v123, %v169
    %v171 = vpop.f32.mrb[0].mxu0
    %v172 = vpop.f32.mrb[0].mxu0
    %v173 = vadd.f32 %v123, %v172
    %v174 = vpop.f32.mrb[0].mxu0
    %175 = vdwg.mxu0
    %v176 = vmax.f32 %v170, 0.0
    %v177 = vmax.f32 %v173, 0.0
    %v178 = vpack.c.bf16 %v177, %v176
    %v179 = vld [vmem:[#allocation2] sm:$0xf]
    %v180 = vld [vmem:[#allocation2 + $0x4] sm:$0xf]
    %v181 = vld [vmem:[#allocation2 + $0x8] sm:$0xf]
    %v182 = vld [vmem:[#allocation2 + $0xc] sm:$0xf]
    %v183 = vld [vmem:[#allocation2 + $0x10] sm:$0xf]
    %v184 = vld [vmem:[#allocation2 + $0x14] sm:$0xf]
    %v185 = vld [vmem:[#allocation2 + $0x18] sm:$0xf]
    %v186 = vld [vmem:[#allocation2 + $0x1c] sm:$0xf]
    %v187 = vld [vmem:[#allocation2 + $0x20] sm:$0xf]
    %v188 = vld [vmem:[#allocation2 + $0x24] sm:$0xf]
    %v189 = vld [vmem:[#allocation2 + $0x28] sm:$0xf]
    %v190 = vld [vmem:[#allocation2 + $0x2c] sm:$0xf]
    %v191 = vld [vmem:[#allocation2 + $0x30] sm:$0xf]
    %v192 = vld [vmem:[#allocation2 + $0x34] sm:$0xf]
    %v193 = vld [vmem:[#allocation2 + $0x38] sm:$0xf]
    %v194 = vld [vmem:[#allocation2 + $0x3c] sm:$0xf]
    %v195 = vld [vmem:[%s4] sm:$0x1]
    %v197 = vlaneseq
    %v198 = vshrl.u32 %v197, 7
    %v199 = vsub.s32 0, %v198
    %v200 = vrot.slane %v195, %v199
    %v218 = vunpack.c.l.b16 %v179
    %v219 = vunpack.c.l.b16 %v180
    %v220 = vunpack.c.l.b16 %v181
    %v221 = vunpack.c.l.b16 %v182
    %v222 = vunpack.c.l.b16 %v183
    %v223 = vunpack.c.l.b16 %v184
    %v224 = vunpack.c.l.b16 %v185
    %v225 = vunpack.c.l.b16 %v186
    %v226 = vunpack.c.l.b16 %v187
    %v227 = vunpack.c.l.b16 %v188
    %v228 = vunpack.c.l.b16 %v189
    %v229 = vunpack.c.l.b16 %v190
    %v230 = vunpack.c.l.b16 %v191
    %v231 = vunpack.c.l.b16 %v192
    %v232 = vunpack.c.l.b16 %v193
    %v233 = vunpack.c.l.b16 %v194
    %v234 = vpack.c.b16 %v219, %v218
    %v235 = vpack.c.b16 %v221, %v220
    %v236 = vpack.c.b16 %v223, %v222
    %v237 = vpack.c.b16 %v225, %v224
    %v238 = vpack.c.b16 %v227, %v226
    %v239 = vpack.c.b16 %v229, %v228
    %v240 = vpack.c.b16 %v231, %v230
    %v241 = vpack.c.b16 %v233, %v232
    %250 = vmatprep.subr.bf16.mxu0 0
    %251 = vmatpush1.bf16.msra.mxu0 %v234
    %252 = vmatprep.subr.bf16.mxu0 0
    %253 = vmatpush1.bf16.msra.mxu0 %v235
    %254 = vmatprep.subr.bf16.mxu0 0
    %255 = vmatpush1.bf16.msra.mxu0 %v236
    %256 = vmatprep.subr.bf16.mxu0 0
    %257 = vmatpush1.bf16.msra.mxu0 %v237
    %258 = vmatprep.subr.bf16.mxu0 0
    %259 = vmatpush1.bf16.msra.mxu0 %v238
    %260 = vmatprep.subr.bf16.mxu0 0
    %261 = vmatpush1.bf16.msra.mxu0 %v239
    %262 = vmatprep.subr.bf16.mxu0 0
    %263 = vmatpush1.bf16.msra.mxu0 %v240
    %264 = vmatprep.subr.bf16.mxu0 0
    %265 = vmatpush1.bf16.msra.mxu0 %v241
    %266 = vmatprep.subr.bf16.mxu0 0
    %267 = vmatpush1.bf16.msra.mxu0 0
    %268 = vmatprep.subr.bf16.mxu0 0
    %269 = vmatpush1.bf16.msra.mxu0 0
    %270 = vmatprep.subr.bf16.mxu0 0
    %271 = vmatpush1.bf16.msra.mxu0 0
    %272 = vmatprep.subr.bf16.mxu0 0
    %273 = vmatpush1.bf16.msra.mxu0 0
    %274 = vmatprep.subr.bf16.mxu0 0
    %275 = vmatpush1.bf16.msra.mxu0 0
    %276 = vmatprep.subr.bf16.mxu0 0
    %277 = vmatpush1.bf16.msra.mxu0 0
    %278 = vmatprep.subr.bf16.mxu0 0
    %279 = vmatpush1.bf16.msra.mxu0 0
    %280 = vmatprep.subr.bf16.mxu0 0
    %281 = vmatpush1.bf16.msra.mxu0 0
    %282 = vmatprep.mubr.bf16.mxu0 0
    %283 = vmatmul.mubr.bf16.gmra.mrb[0].mxu0 %v178
    %v284 = vpop.f32.mrb[0].mxu0
    %v285 = vadd.f32 %v200, %v284
    %v286 = vpop.f32.mrb[0].mxu0
    %v287 = vpop.f32.mrb[0].mxu0
    %v288 = vadd.f32 %v200, %v287
    %v289 = vpop.f32.mrb[0].mxu0
    %290 = vdwg.mxu0
    %v291 = vmax.f32 %v285, 0.0
    %v292 = vmax.f32 %v288, 0.0
    %v293 = vpack.c.bf16 %v292, %v291
    %v294 = vld [vmem:[#allocation4] sm:$0xf]
    %v295 = vld [vmem:[#allocation4 + $0x4] sm:$0xf]
    %v296 = vld [vmem:[#allocation4 + $0x8] sm:$0xf]
    %v297 = vld [vmem:[#allocation4 + $0xc] sm:$0xf]
    %v298 = vld [vmem:[#allocation4 + $0x10] sm:$0xf]
    %v299 = vld [vmem:[#allocation4 + $0x14] sm:$0xf]
    %v300 = vld [vmem:[#allocation4 + $0x18] sm:$0xf]
    %v301 = vld [vmem:[#allocation4 + $0x1c] sm:$0xf]
    %v302 = vld [vmem:[#allocation4 + $0x20] sm:$0xf]
    %v303 = vld [vmem:[#allocation4 + $0x24] sm:$0xf]
    %v304 = vld [vmem:[#allocation4 + $0x28] sm:$0xf]
    %v305 = vld [vmem:[#allocation4 + $0x2c] sm:$0xf]
    %v306 = vld [vmem:[#allocation4 + $0x30] sm:$0xf]
    %v307 = vld [vmem:[#allocation4 + $0x34] sm:$0xf]
    %v308 = vld [vmem:[#allocation4 + $0x38] sm:$0xf]
    %v309 = vld [vmem:[#allocation4 + $0x3c] sm:$0xf]
    %v310 = vld [vmem:[%s6] sm:$0x1]
    %v312 = vlaneseq
    %v313 = vshrl.u32 %v312, 7
    %v314 = vsub.s32 0, %v313
    %v315 = vrot.slane %v310, %v314
    %v333 = vunpack.c.l.b16 %v294
    %v334 = vunpack.c.l.b16 %v295
    %v335 = vunpack.c.l.b16 %v296
    %v336 = vunpack.c.l.b16 %v297
    %v337 = vunpack.c.l.b16 %v298
    %v338 = vunpack.c.l.b16 %v299
    %v339 = vunpack.c.l.b16 %v300
    %v340 = vunpack.c.l.b16 %v301
    %v341 = vunpack.c.l.b16 %v302
    %v342 = vunpack.c.l.b16 %v303
    %v343 = vunpack.c.l.b16 %v304
    %v344 = vunpack.c.l.b16 %v305
    %v345 = vunpack.c.l.b16 %v306
    %v346 = vunpack.c.l.b16 %v307
    %v347 = vunpack.c.l.b16 %v308
    %v348 = vunpack.c.l.b16 %v309
    %v349 = vpack.c.b16 %v334, %v333
    %v350 = vpack.c.b16 %v336, %v335
    %v351 = vpack.c.b16 %v338, %v337
    %v352 = vpack.c.b16 %v340, %v339
    %v353 = vpack.c.b16 %v342, %v341
    %v354 = vpack.c.b16 %v344, %v343
    %v355 = vpack.c.b16 %v346, %v345
    %v356 = vpack.c.b16 %v348, %v347
    %365 = vmatprep.subr.bf16.mxu0 0
    %366 = vmatpush1.bf16.msra.mxu0 %v349
    %367 = vmatprep.subr.bf16.mxu0 0
    %368 = vmatpush1.bf16.msra.mxu0 %v350
    %369 = vmatprep.subr.bf16.mxu0 0
    %370 = vmatpush1.bf16.msra.mxu0 %v351
    %371 = vmatprep.subr.bf16.mxu0 0
    %372 = vmatpush1.bf16.msra.mxu0 %v352
    %373 = vmatprep.subr.bf16.mxu0 0
    %374 = vmatpush1.bf16.msra.mxu0 %v353
    %375 = vmatprep.subr.bf16.mxu0 0
    %376 = vmatpush1.bf16.msra.mxu0 %v354
    %377 = vmatprep.subr.bf16.mxu0 0
    %378 = vmatpush1.bf16.msra.mxu0 %v355
    %379 = vmatprep.subr.bf16.mxu0 0
    %380 = vmatpush1.bf16.msra.mxu0 %v356
    %381 = vmatprep.subr.bf16.mxu0 0
    %382 = vmatpush1.bf16.msra.mxu0 0
    %383 = vmatprep.subr.bf16.mxu0 0
    %384 = vmatpush1.bf16.msra.mxu0 0
    %385 = vmatprep.subr.bf16.mxu0 0
    %386 = vmatpush1.bf16.msra.mxu0 0
    %387 = vmatprep.subr.bf16.mxu0 0
    %388 = vmatpush1.bf16.msra.mxu0 0
    %389 = vmatprep.subr.bf16.mxu0 0
    %390 = vmatpush1.bf16.msra.mxu0 0
    %391 = vmatprep.subr.bf16.mxu0 0
    %392 = vmatpush1.bf16.msra.mxu0 0
    %393 = vmatprep.subr.bf16.mxu0 0
    %394 = vmatpush1.bf16.msra.mxu0 0
    %395 = vmatprep.subr.bf16.mxu0 0
    %396 = vmatpush1.bf16.msra.mxu0 0
    %397 = vmatprep.mubr.bf16.mxu0 0
    %398 = vmatmul.mubr.bf16.gmra.mrb[0].mxu0 %v293
    %v399 = vpop.f32.mrb[0].mxu0
    %v400 = vadd.f32 %v315, %v399
    %v401 = vpop.f32.mrb[0].mxu0
    %v402 = vpop.f32.mrb[0].mxu0
    %v403 = vadd.f32 %v315, %v402
    %v404 = vpop.f32.mrb[0].mxu0
    %405 = vdwg.mxu0
    %v406 = vmax.f32 %v400, 0.0
    %v407 = vmax.f32 %v403, 0.0
    %v408 = vpack.c.bf16 %v407, %v406
    %v409 = vld [vmem:[#allocation6] sm:$0xf]
    %v410 = vld [vmem:[#allocation6 + $0x4] sm:$0xf]
    %v411 = vld [vmem:[#allocation6 + $0x8] sm:$0xf]
    %v412 = vld [vmem:[#allocation6 + $0xc] sm:$0xf]
    %v413 = vld [vmem:[#allocation6 + $0x10] sm:$0xf]
    %v414 = vld [vmem:[#allocation6 + $0x14] sm:$0xf]
    %v415 = vld [vmem:[#allocation6 + $0x18] sm:$0xf]
    %v416 = vld [vmem:[#allocation6 + $0x1c] sm:$0xf]
    %v417 = vld [vmem:[#allocation6 + $0x20] sm:$0xf]
    %v418 = vld [vmem:[#allocation6 + $0x24] sm:$0xf]
    %v419 = vld [vmem:[#allocation6 + $0x28] sm:$0xf]
    %v420 = vld [vmem:[#allocation6 + $0x2c] sm:$0xf]
    %v421 = vld [vmem:[#allocation6 + $0x30] sm:$0xf]
    %v422 = vld [vmem:[#allocation6 + $0x34] sm:$0xf]
    %v423 = vld [vmem:[#allocation6 + $0x38] sm:$0xf]
    %v424 = vld [vmem:[#allocation6 + $0x3c] sm:$0xf]
    %v425 = vld [vmem:[%s8] sm:$0x1]
    %v427 = vlaneseq
    %v428 = vshrl.u32 %v427, 7
    %v429 = vsub.s32 0, %v428
    %v430 = vrot.slane %v425, %v429
    %v448 = vunpack.c.l.b16 %v409
    %v449 = vunpack.c.l.b16 %v410
    %v450 = vunpack.c.l.b16 %v411
    %v451 = vunpack.c.l.b16 %v412
    %v452 = vunpack.c.l.b16 %v413
    %v453 = vunpack.c.l.b16 %v414
    %v454 = vunpack.c.l.b16 %v415
    %v455 = vunpack.c.l.b16 %v416
    %v456 = vunpack.c.l.b16 %v417
    %v457 = vunpack.c.l.b16 %v418
    %v458 = vunpack.c.l.b16 %v419
    %v459 = vunpack.c.l.b16 %v420
    %v460 = vunpack.c.l.b16 %v421
    %v461 = vunpack.c.l.b16 %v422
    %v462 = vunpack.c.l.b16 %v423
    %v463 = vunpack.c.l.b16 %v424
    %v464 = vpack.c.b16 %v449, %v448
    %v465 = vpack.c.b16 %v451, %v450
    %v466 = vpack.c.b16 %v453, %v452
    %v467 = vpack.c.b16 %v455, %v454
    %v468 = vpack.c.b16 %v457, %v456
    %v469 = vpack.c.b16 %v459, %v458
    %v470 = vpack.c.b16 %v461, %v460
    %v471 = vpack.c.b16 %v463, %v462
    %480 = vmatprep.subr.bf16.mxu0 0
    %481 = vmatpush1.bf16.msra.mxu0 %v464
    %482 = vmatprep.subr.bf16.mxu0 0
    %483 = vmatpush1.bf16.msra.mxu0 %v465
    %484 = vmatprep.subr.bf16.mxu0 0
    %485 = vmatpush1.bf16.msra.mxu0 %v466
    %486 = vmatprep.subr.bf16.mxu0 0
    %487 = vmatpush1.bf16.msra.mxu0 %v467
    %488 = vmatprep.subr.bf16.mxu0 0
    %489 = vmatpush1.bf16.msra.mxu0 %v468
    %490 = vmatprep.subr.bf16.mxu0 0
    %491 = vmatpush1.bf16.msra.mxu0 %v469
    %492 = vmatprep.subr.bf16.mxu0 0
    %493 = vmatpush1.bf16.msra.mxu0 %v470
    %494 = vmatprep.subr.bf16.mxu0 0
    %495 = vmatpush1.bf16.msra.mxu0 %v471
    %496 = vmatprep.subr.bf16.mxu0 0
    %497 = vmatpush1.bf16.msra.mxu0 0
    %498 = vmatprep.subr.bf16.mxu0 0
    %499 = vmatpush1.bf16.msra.mxu0 0
    %500 = vmatprep.subr.bf16.mxu0 0
    %501 = vmatpush1.bf16.msra.mxu0 0
    %502 = vmatprep.subr.bf16.mxu0 0
    %503 = vmatpush1.bf16.msra.mxu0 0
    %504 = vmatprep.subr.bf16.mxu0 0
    %505 = vmatpush1.bf16.msra.mxu0 0
    %506 = vmatprep.subr.bf16.mxu0 0
    %507 = vmatpush1.bf16.msra.mxu0 0
    %508 = vmatprep.subr.bf16.mxu0 0
    %509 = vmatpush1.bf16.msra.mxu0 0
    %510 = vmatprep.subr.bf16.mxu0 0
    %511 = vmatpush1.bf16.msra.mxu0 0
    %512 = vmatprep.mubr.bf16.mxu0 0
    %513 = vmatmul.mubr.bf16.gmra.mrb[0].mxu0 %v408
    %v514 = vpop.f32.mrb[0].mxu0
    %v515 = vadd.f32 %v430, %v514
    %v516 = vpop.f32.mrb[0].mxu0
    %v517 = vpop.f32.mrb[0].mxu0
    %v518 = vadd.f32 %v430, %v517
    %v519 = vpop.f32.mrb[0].mxu0
    %520 = vdwg.mxu0
    %v521 = vmax.f32 %v515, 0.0
    %v522 = vmax.f32 %v518, 0.0
    %v523 = vpack.c.bf16 %v522, %v521
    %v524 = vld [vmem:[#allocation7] sm:$0xff]
    %v525 = vld [vmem:[#allocation7 + $0x8] sm:$0xff]
    %v526 = vld [vmem:[#allocation7 + $0x10] sm:$0xff]
    %v527 = vld [vmem:[#allocation7 + $0x18] sm:$0xff]
    %v528 = vld [vmem:[#allocation7 + $0x20] sm:$0xff]
    %v529 = vld [vmem:[#allocation7 + $0x28] sm:$0xff]
    %v530 = vld [vmem:[#allocation7 + $0x30] sm:$0xff]
    %v531 = vld [vmem:[#allocation7 + $0x38] sm:$0xff]
    %v532 = vld [vmem:[#allocation7 + $0x40] sm:$0xff]
    %v533 = vld [vmem:[#allocation7 + $0x48] sm:$0xff]
    %v534 = vld [vmem:[#allocation7 + $0x50] sm:$0xff]
    %v535 = vld [vmem:[#allocation7 + $0x58] sm:$0xff]
    %v536 = vld [vmem:[#allocation7 + $0x60] sm:$0xff]
    %v537 = vld [vmem:[#allocation7 + $0x68] sm:$0xff]
    %v538 = vld [vmem:[#allocation7 + $0x70] sm:$0xff]
    %v539 = vld [vmem:[#allocation7 + $0x78] sm:$0xff]
    %v540 = vld [vmem:[%s10] sm:$0x3]
    %v542 = vlaneseq
    %v543 = vshrl.u32 %v542, 7
    %v544 = vsub.s32 0, %v543
    %v545 = vrot.slane %v540, %v544
    %v546 = vlaneseq
    %v547 = vshrl.u32 %v546, 7
    %v548 = vsub.s32 1, %v547
    %v549 = vrot.slane %v540, %v548
    %v568 = vunpack.c.l.b16 %v524
    %v569 = vunpack.c.h.b16 %v524
    %v570 = vunpack.c.l.b16 %v525
    %v571 = vunpack.c.h.b16 %v525
    %v572 = vunpack.c.l.b16 %v526
    %v573 = vunpack.c.h.b16 %v526
    %v574 = vunpack.c.l.b16 %v527
    %v575 = vunpack.c.h.b16 %v527
    %v576 = vunpack.c.l.b16 %v528
    %v577 = vunpack.c.h.b16 %v528
    %v578 = vunpack.c.l.b16 %v529
    %v579 = vunpack.c.h.b16 %v529
    %v580 = vunpack.c.l.b16 %v530
    %v581 = vunpack.c.h.b16 %v530
    %v582 = vunpack.c.l.b16 %v531
    %v583 = vunpack.c.h.b16 %v531
    %v584 = vunpack.c.l.b16 %v532
    %v585 = vunpack.c.h.b16 %v532
    %v586 = vunpack.c.l.b16 %v533
    %v587 = vunpack.c.h.b16 %v533
    %v588 = vunpack.c.l.b16 %v534
    %v589 = vunpack.c.h.b16 %v534
    %v590 = vunpack.c.l.b16 %v535
    %v591 = vunpack.c.h.b16 %v535
    %v592 = vunpack.c.l.b16 %v536
    %v593 = vunpack.c.h.b16 %v536
    %v594 = vunpack.c.l.b16 %v537
    %v595 = vunpack.c.h.b16 %v537
    %v596 = vunpack.c.l.b16 %v538
    %v597 = vunpack.c.h.b16 %v538
    %v598 = vunpack.c.l.b16 %v539
    %v599 = vunpack.c.h.b16 %v539
    %v600 = vpack.c.b16 %v570, %v568
    %v601 = vpack.c.b16 %v571, %v569
    %v602 = vpack.c.b16 %v574, %v572
    %v603 = vpack.c.b16 %v575, %v573
    %v604 = vpack.c.b16 %v578, %v576
    %v605 = vpack.c.b16 %v579, %v577
    %v606 = vpack.c.b16 %v582, %v580
    %v607 = vpack.c.b16 %v583, %v581
    %v608 = vpack.c.b16 %v586, %v584
    %v609 = vpack.c.b16 %v587, %v585
    %v610 = vpack.c.b16 %v590, %v588
    %v611 = vpack.c.b16 %v591, %v589
    %v612 = vpack.c.b16 %v594, %v592
    %v613 = vpack.c.b16 %v595, %v593
    %v614 = vpack.c.b16 %v598, %v596
    %v615 = vpack.c.b16 %v599, %v597
    %632 = vmatprep.subr.bf16.mxu0 %v601
    %633 = vmatpush1.bf16.msra.mxu0 %v600
    %634 = vmatprep.subr.bf16.mxu0 %v603
    %635 = vmatpush1.bf16.msra.mxu0 %v602
    %636 = vmatprep.subr.bf16.mxu0 %v605
    %637 = vmatpush1.bf16.msra.mxu0 %v604
    %638 = vmatprep.subr.bf16.mxu0 %v607
    %639 = vmatpush1.bf16.msra.mxu0 %v606
    %640 = vmatprep.subr.bf16.mxu0 %v609
    %641 = vmatpush1.bf16.msra.mxu0 %v608
    %642 = vmatprep.subr.bf16.mxu0 %v611
    %643 = vmatpush1.bf16.msra.mxu0 %v610
    %644 = vmatprep.subr.bf16.mxu0 %v613
    %645 = vmatpush1.bf16.msra.mxu0 %v612
    %646 = vmatprep.subr.bf16.mxu0 %v615
    %647 = vmatpush1.bf16.msra.mxu0 %v614
    %648 = vmatprep.subr.bf16.mxu0 0
    %649 = vmatpush1.bf16.msra.mxu0 0
    %650 = vmatprep.subr.bf16.mxu0 0
    %651 = vmatpush1.bf16.msra.mxu0 0
    %652 = vmatprep.subr.bf16.mxu0 0
    %653 = vmatpush1.bf16.msra.mxu0 0
    %654 = vmatprep.subr.bf16.mxu0 0
    %655 = vmatpush1.bf16.msra.mxu0 0
    %656 = vmatprep.subr.bf16.mxu0 0
    %657 = vmatpush1.bf16.msra.mxu0 0
    %658 = vmatprep.subr.bf16.mxu0 0
    %659 = vmatpush1.bf16.msra.mxu0 0
    %660 = vmatprep.subr.bf16.mxu0 0
    %661 = vmatpush1.bf16.msra.mxu0 0
    %662 = vmatprep.subr.bf16.mxu0 0
    %663 = vmatpush1.bf16.msra.mxu0 0
    %664 = vmatprep.mubr.bf16.mxu0 0
    %665 = vmatmul.mubr.bf16.gmra.mrb[0].mxu0 %v523
    %v666 = vpop.f32.mrb[0].mxu0
    %v667 = vadd.f32 %v545, %v666
    %v668 = vpop.f32.mrb[0].mxu0
    %v669 = vadd.f32 %v549, %v668
    %v670 = vpop.f32.mrb[0].mxu0
    %v671 = vadd.f32 %v545, %v670
    %v672 = vpop.f32.mrb[0].mxu0
    %v673 = vadd.f32 %v549, %v672
    %674 = vdwg.mxu0
    %v675 = vmax.f32 %v667, 0.0
    %v676 = vmax.f32 %v669, 0.0
    %v677 = vmax.f32 %v671, 0.0
    %v678 = vmax.f32 %v673, 0.0
    %v679 = vpack.c.bf16 %v677, %v675
    %v680 = vpack.c.bf16 %v678, %v676
    %v681 = vld [vmem:[#allocation9] sm:$0xf]
    %v682 = vld [vmem:[#allocation9 + $0x4] sm:$0xf]
    %v683 = vld [vmem:[#allocation9 + $0x8] sm:$0xf]
    %v684 = vld [vmem:[#allocation9 + $0xc] sm:$0xf]
    %v685 = vld [vmem:[#allocation9 + $0x10] sm:$0xf]
    %v686 = vld [vmem:[#allocation9 + $0x14] sm:$0xf]
    %v687 = vld [vmem:[#allocation9 + $0x18] sm:$0xf]
    %v688 = vld [vmem:[#allocation9 + $0x1c] sm:$0xf]
    %v689 = vld [vmem:[#allocation9 + $0x20] sm:$0xf]
    %v690 = vld [vmem:[#allocation9 + $0x24] sm:$0xf]
    %v691 = vld [vmem:[#allocation9 + $0x28] sm:$0xf]
    %v692 = vld [vmem:[#allocation9 + $0x2c] sm:$0xf]
    %v693 = vld [vmem:[#allocation9 + $0x30] sm:$0xf]
    %v694 = vld [vmem:[#allocation9 + $0x34] sm:$0xf]
    %v695 = vld [vmem:[#allocation9 + $0x38] sm:$0xf]
    %v696 = vld [vmem:[#allocation9 + $0x3c] sm:$0xf]
    %v697 = vld [vmem:[#allocation9 + $0x40] sm:$0xf]
    %v698 = vld [vmem:[#allocation9 + $0x44] sm:$0xf]
    %v699 = vld [vmem:[#allocation9 + $0x48] sm:$0xf]
    %v700 = vld [vmem:[#allocation9 + $0x4c] sm:$0xf]
    %v701 = vld [vmem:[#allocation9 + $0x50] sm:$0xf]
    %v702 = vld [vmem:[#allocation9 + $0x54] sm:$0xf]
    %v703 = vld [vmem:[#allocation9 + $0x58] sm:$0xf]
    %v704 = vld [vmem:[#allocation9 + $0x5c] sm:$0xf]
    %v705 = vld [vmem:[#allocation9 + $0x60] sm:$0xf]
    %v706 = vld [vmem:[#allocation9 + $0x64] sm:$0xf]
    %v707 = vld [vmem:[#allocation9 + $0x68] sm:$0xf]
    %v708 = vld [vmem:[#allocation9 + $0x6c] sm:$0xf]
    %v709 = vld [vmem:[#allocation9 + $0x70] sm:$0xf]
    %v710 = vld [vmem:[#allocation9 + $0x74] sm:$0xf]
    %v711 = vld [vmem:[#allocation9 + $0x78] sm:$0xf]
    %v712 = vld [vmem:[#allocation9 + $0x7c] sm:$0xf]
    %v713 = vld [vmem:[%s12] sm:$0x1]
    %v715 = vlaneseq
    %v716 = vshrl.u32 %v715, 7
    %v717 = vsub.s32 0, %v716
    %v718 = vrot.slane %v713, %v717
    %v752 = vunpack.c.l.b16 %v681
    %v753 = vunpack.c.l.b16 %v682
    %v754 = vunpack.c.l.b16 %v683
    %v755 = vunpack.c.l.b16 %v684
    %v756 = vunpack.c.l.b16 %v685
    %v757 = vunpack.c.l.b16 %v686
    %v758 = vunpack.c.l.b16 %v687
    %v759 = vunpack.c.l.b16 %v688
    %v760 = vunpack.c.l.b16 %v689
    %v761 = vunpack.c.l.b16 %v690
    %v762 = vunpack.c.l.b16 %v691
    %v763 = vunpack.c.l.b16 %v692
    %v764 = vunpack.c.l.b16 %v693
    %v765 = vunpack.c.l.b16 %v694
    %v766 = vunpack.c.l.b16 %v695
    %v767 = vunpack.c.l.b16 %v696
    %v768 = vunpack.c.l.b16 %v697
    %v769 = vunpack.c.l.b16 %v698
    %v770 = vunpack.c.l.b16 %v699
    %v771 = vunpack.c.l.b16 %v700
    %v772 = vunpack.c.l.b16 %v701
    %v773 = vunpack.c.l.b16 %v702
    %v774 = vunpack.c.l.b16 %v703
    %v775 = vunpack.c.l.b16 %v704
    %v776 = vunpack.c.l.b16 %v705
    %v777 = vunpack.c.l.b16 %v706
    %v778 = vunpack.c.l.b16 %v707
    %v779 = vunpack.c.l.b16 %v708
    %v780 = vunpack.c.l.b16 %v709
    %v781 = vunpack.c.l.b16 %v710
    %v782 = vunpack.c.l.b16 %v711
    %v783 = vunpack.c.l.b16 %v712
    %v784 = vpack.c.b16 %v753, %v752
    %v785 = vpack.c.b16 %v755, %v754
    %v786 = vpack.c.b16 %v757, %v756
    %v787 = vpack.c.b16 %v759, %v758
    %v788 = vpack.c.b16 %v761, %v760
    %v789 = vpack.c.b16 %v763, %v762
    %v790 = vpack.c.b16 %v765, %v764
    %v791 = vpack.c.b16 %v767, %v766
    %v792 = vpack.c.b16 %v769, %v768
    %v793 = vpack.c.b16 %v771, %v770
    %v794 = vpack.c.b16 %v773, %v772
    %v795 = vpack.c.b16 %v775, %v774
    %v796 = vpack.c.b16 %v777, %v776
    %v797 = vpack.c.b16 %v779, %v778
    %v798 = vpack.c.b16 %v781, %v780
    %v799 = vpack.c.b16 %v783, %v782
    %816 = vmatprep.subr.bf16.mxu0 0
    %817 = vmatpush1.bf16.msra.mxu0 %v784
    %818 = vmatprep.subr.bf16.mxu0 0
    %819 = vmatpush1.bf16.msra.mxu0 %v785
    %820 = vmatprep.subr.bf16.mxu0 0
    %821 = vmatpush1.bf16.msra.mxu0 %v786
    %822 = vmatprep.subr.bf16.mxu0 0
    %823 = vmatpush1.bf16.msra.mxu0 %v787
    %824 = vmatprep.subr.bf16.mxu0 0
    %825 = vmatpush1.bf16.msra.mxu0 %v788
    %826 = vmatprep.subr.bf16.mxu0 0
    %827 = vmatpush1.bf16.msra.mxu0 %v789
    %828 = vmatprep.subr.bf16.mxu0 0
    %829 = vmatpush1.bf16.msra.mxu0 %v790
    %830 = vmatprep.subr.bf16.mxu0 0
    %831 = vmatpush1.bf16.msra.mxu0 %v791
    %832 = vmatprep.subr.bf16.mxu0 0
    %833 = vmatpush1.bf16.msra.mxu0 %v792
    %834 = vmatprep.subr.bf16.mxu0 0
    %835 = vmatpush1.bf16.msra.mxu0 %v793
    %836 = vmatprep.subr.bf16.mxu0 0
    %837 = vmatpush1.bf16.msra.mxu0 %v794
    %838 = vmatprep.subr.bf16.mxu0 0
    %839 = vmatpush1.bf16.msra.mxu0 %v795
    %840 = vmatprep.subr.bf16.mxu0 0
    %841 = vmatpush1.bf16.msra.mxu0 %v796
    %842 = vmatprep.subr.bf16.mxu0 0
    %843 = vmatpush1.bf16.msra.mxu0 %v797
    %844 = vmatprep.subr.bf16.mxu0 0
    %845 = vmatpush1.bf16.msra.mxu0 %v798
    %846 = vmatprep.subr.bf16.mxu0 0
    %847 = vmatpush1.bf16.msra.mxu0 %v799
    %848 = vmatprep.mubr.bf16.mxu0 %v680
    %849 = vmatmul.mubr.bf16.gmra.mrb[0].mxu0 %v679
    %v850 = vpop.f32.mrb[0].mxu0
    %v851 = vadd.f32 %v718, %v850
    %v852 = vpop.f32.mrb[0].mxu0
    %v853 = vpop.f32.mrb[0].mxu0
    %v854 = vadd.f32 %v718, %v853
    %v855 = vpop.f32.mrb[0].mxu0
    %856 = vdwg.mxu0
    %v857 = vsub.f32 0.0, %v851
    %v858 = vsub.f32 0.0, %v854
    %v859 = vmul.f32 %v857, 1.442695
    %v860 = vpow.pop %v859
    %v861 = vmul.f32 %v858, 1.442695
    %v862 = vpow.pop %v861
    %v863 = vadd.f32 %v860, 1.0
    %v864 = vadd.f32 %v862, 1.0
    %v865 = vrcp.pop %v863
    %v866 = vrcp.pop %v864
    %867 = vst [vmem:[%s13] sm:$0xff] %v865
    %868 = vst [vmem:[%s13 + $0x8] sm:$0xff] %v866
    // Predicated region
    $region74: #{net_forward.1} parent=1 // pred_check
      _
    $region75: #{net_forward.1} parent=1 // pred_check_branch
      %870 = sbr.rel (0) target = $region77
    $region76: #{net_forward.1} parent=1 // pred_region
      _
    $region77: #{net_forward.1} parent=1 // pred_fallthru
      _
    // Predicated region
    $region78: #{net_forward.1} parent=1 // pred_check
      _
    $region79: #{net_forward.1} parent=1 // pred_check_branch
      %872 = sbr.rel (0) target = $region81
    $region80: #{net_forward.1} parent=1 // pred_region
      _
    $region81: #{net_forward.1} parent=1 // pred_fallthru
      _
    %873 = vsyncpa [#allocation3], 1
    %874 = vsyncpa [#allocation5], 1
    %875 = vsyncpa [#allocation8], 1

</llo_original>
